<compile_context>
chip_gen: v5e
topology: v5e:2x2
jax: 0.10.0
libtpu: 0.0.40
codegen_flags: <defaults>
</compile_context>

<pallas_src>
import jax
import jax.numpy as jnp
from jax.experimental import pallas as pl
from jax.experimental.pallas import tpu as pltpu


# ---------------------------------------------------------------------------
# Hardware-derived VMEM budgets.
# ---------------------------------------------------------------------------

_VMEM_FRACTION = 0.6                      # leave 40% for weights / Mosaic scratch
_DEFAULT_VMEM_CAPACITY = 64 * 2 ** 20     # conservative fallback (v7x per-TC)


def _tpu_vmem_capacity_bytes():
    try:
        info = pltpu.get_tpu_info()
        for name in ("vmem_capacity_bytes", "vmem_bytes", "vmem_size_bytes"):
            v = getattr(info, name, None)
            if v:
                return int(v)
    except Exception:
        pass
    return _DEFAULT_VMEM_CAPACITY


def _derived_block_budget_bytes():
    # ~38 MiB on v7x (64 MiB VMEM/TC), ~76 MiB on v5e/v6e (128 MiB VMEM).
    return int(_VMEM_FRACTION * _tpu_vmem_capacity_bytes())


def _vmem_limit_bytes(working_set_bytes):
    cap = _derived_block_budget_bytes()
    want = int(1.25 * working_set_bytes) + (4 * 2 ** 20)
    return int(min(max(want, 32 * 2 ** 20), cap))


# ---------------------------------------------------------------------------
# Excite path (shared by both kernels).
# ---------------------------------------------------------------------------

def _excite(pooled, w1, b1, w2t, b2t):
    """SE excite path, entirely in channels-on-sublanes layout.

    pooled: (..., C, 1) f32 pooled activations.
    w1:  (C, Cr)  -- transpose of Conv2d(C, Cr, 1).weight
    b1:  (1, Cr)
    w2t: (C, Cr)  -- Conv2d(Cr, C, 1).weight in its natural (out, in) layout
    b2t: (C, 1)
    Returns the gate, shape (..., C, 1), f32.

    Deliberately NOT an MXU matmul: Cr is tiny (<1% MXU utilization) and the
    broadcast-multiply + cross-sublane/lane reductions ride free VPU/XLU slots
    while staying in the (C, 1) sublane layout needed for the free lane
    broadcast in `x * gate`.
    """
    h = jnp.sum(w1 * pooled, axis=-2, keepdims=True) + b1    # (..., 1, Cr)
    h = jnp.maximum(h, 0.0)                                  # ReLU
    g = jnp.sum(w2t * h, axis=-1, keepdims=True) + b2t       # (..., C, 1)
    return jax.nn.sigmoid(g)


# ---------------------------------------------------------------------------
# Fast path: read-once single pass, TB batch elements per grid step.
# ---------------------------------------------------------------------------

def _se_single_pass(x_flat, w1, b1, w2t, b2t, tb):
    B, C, HW = x_flat.shape
    Cr = w1.shape[1]
    inv_hw = 1.0 / float(HW)
    itemsize = x_flat.dtype.itemsize

    def kernel(x_ref, w1_ref, b1_ref, w2t_ref, b2t_ref, o_ref):
        x = x_ref[...]                                           # (TB, C, HW)
        # Squeeze: lane-axis (spatial) sum with f32 accumulation; 1/HW is a
        # trace-time constant.
        pooled = jnp.sum(x, axis=-1, keepdims=True,
                         dtype=jnp.float32) * inv_hw             # (TB, C, 1)
        g = _excite(pooled,
                    w1_ref[...].astype(jnp.float32),
                    b1_ref[...].astype(jnp.float32),
                    w2t_ref[...].astype(jnp.float32),
                    b2t_ref[...].astype(jnp.float32))            # (TB, C, 1)
        # Scale in the input dtype; (TB, C, 1) broadcasts along lanes for free.
        o_ref[...] = x * g.astype(o_ref.dtype)

    block_bytes = tb * C * HW * itemsize
    cost = pl.CostEstimate(
        flops=2 * B * C * HW + 6 * B * C * Cr,
        transcendentals=B * C,
        bytes_accessed=2 * B * C * HW * itemsize)

    return pl.pallas_call(
        kernel,
        out_shape=jax.ShapeDtypeStruct((B, C, HW), x_flat.dtype),
        grid=(B // tb,),
        in_specs=[
            pl.BlockSpec((tb, C, HW), lambda b: (b, 0, 0)),
            pl.BlockSpec((C, Cr), lambda b: (0, 0)),
            pl.BlockSpec((1, Cr), lambda b: (0, 0)),
            pl.BlockSpec((C, Cr), lambda b: (0, 0)),
            pl.BlockSpec((C, 1), lambda b: (0, 0)),
        ],
        out_specs=pl.BlockSpec((tb, C, HW), lambda b: (b, 0, 0)),
        compiler_params=pltpu.CompilerParams(
            dimension_semantics=("parallel",),
            vmem_limit_bytes=_vmem_limit_bytes(4 * block_bytes)),
        cost_estimate=cost,
    )(x_flat, w1, b1, w2t, b2t)


# ---------------------------------------------------------------------------
# VMEM-constrained path: fused pool+gate / rescale, tiled over HW.
# ---------------------------------------------------------------------------

def _maybe_buffered_spec(block_shape, index_map, buffer_count):
    """BlockSpec with deeper pipelining when supported; plain spec otherwise."""
    if buffer_count > 2:
        try:
            return pl.BlockSpec(block_shape, index_map,
                                pipeline_mode=pl.Buffered(buffer_count))
        except Exception:
            pass
    return pl.BlockSpec(block_shape, index_map)


def _se_fused_two_phase(x_flat, w1, b1, w2t, b2t, block_budget_bytes):
    """Single pallas_call, grid=(B, 2 phases, HW tiles); gate kept in VMEM."""
    B, C, HW = x_flat.shape
    Cr = w1.shape[1]
    inv_hw = 1.0 / float(HW)       # true HW: zero-padding keeps the mean exact
    itemsize = x_flat.dtype.itemsize

    # Pad the spatial axis to a lane-dense multiple of 128 (unmasked vst) so
    # tiling never blows the very VMEM budget that forced this path.
    hw_pad = ((HW + 127) // 128) * 128
    if hw_pad != HW:
        x_flat = jnp.pad(x_flat, ((0, 0), (0, 0), (0, hw_pad - HW)))

    # Largest multiple-of-128 tile dividing hw_pad whose double-buffered
    # in+out blocks fit the budget.
    thw = 128
    for k in range(hw_pad // 128, 0, -1):
        cand = 128 * k
        if hw_pad % cand == 0 and 4 * C * cand * itemsize <= block_budget_bytes:
            thw = cand
            break
    n_hw = hw_pad // thw

    # Small tiles -> trivial per-tile compute -> DMA latency exposed: deepen
    # the input pipeline to keep the DMA engine ahead.
    in_buffers = 3 if thw <= 256 else 2
    x_spec = _maybe_buffered_spec((None, C, thw),
                                  lambda b, p, s: (b, 0, s), in_buffers)
    working_set = (in_buffers + 2) * C * thw * itemsize

    def kernel(x_ref, w1_ref, b1_ref, w2t_ref, b2t_ref, o_ref, acc_sc, g_sc):
        p = pl.program_id(1)
        s = pl.program_id(2)

        @pl.when((p == 0) & (s == 0))
        def _init():
            acc_sc[...] = jnp.zeros_like(acc_sc)

        @pl.when(p == 0)
        def _pool():
            # Partial spatial sum for this HW tile (f32 accumulation).
            acc_sc[...] += jnp.sum(x_ref[...], axis=-1, keepdims=True,
                                   dtype=jnp.float32)

            @pl.when(s == pl.num_programs(2) - 1)
            def _gate():
                g_sc[...] = _excite(acc_sc[...] * inv_hw,
                                    w1_ref[...].astype(jnp.float32),
                                    b1_ref[...].astype(jnp.float32),
                                    w2t_ref[...].astype(jnp.float32),
                                    b2t_ref[...].astype(jnp.float32))

        @pl.when(p == 1)
        def _scale():
            o_ref[...] = x_ref[...] * g_sc[...].astype(o_ref.dtype)

    out = pl.pallas_call(
        kernel,
        out_shape=jax.ShapeDtypeStruct((B, C, hw_pad), x_flat.dtype),
        grid=(B, 2, n_hw),
        in_specs=[
            x_spec,
            pl.BlockSpec((C, Cr), lambda b, p, s: (0, 0)),
            pl.BlockSpec((1, Cr), lambda b, p, s: (0, 0)),
            pl.BlockSpec((C, Cr), lambda b, p, s: (0, 0)),
            pl.BlockSpec((C, 1), lambda b, p, s: (0, 0)),
        ],
        # Phase 0 pins the output block index to tile 0, so the never-written
        # output buffer is not flushed until phase 1 has filled it; phase 1
        # then visits every tile exactly once.
        out_specs=pl.BlockSpec((None, C, thw), lambda b, p, s: (b, 0, p * s)),
        scratch_shapes=[pltpu.VMEM((C, 1), jnp.float32),   # pooled-sum accum
                        pltpu.VMEM((C, 1), jnp.float32)],  # sigmoid gate
        compiler_params=pltpu.CompilerParams(
            dimension_semantics=("parallel", "arbitrary", "arbitrary"),
            vmem_limit_bytes=_vmem_limit_bytes(working_set)),
        cost_estimate=pl.CostEstimate(
            flops=2 * B * C * HW + 6 * B * C * Cr,
            transcendentals=B * C,
            bytes_accessed=3 * B * C * hw_pad * itemsize),
    )(x_flat, w1, b1, w2t, b2t)

    if hw_pad != HW:
        out = out[:, :, :HW]
    return out


# ---------------------------------------------------------------------------
# Wrapper.
# ---------------------------------------------------------------------------

def _choose_batch_tile(B, per_elem_bytes, budget):
    """Largest TB dividing B whose double-buffered in+out blocks fit `budget`,
    capped so the parallel grid keeps >= 2 steps when B >= 2 (v7x megacore)."""
    if per_elem_bytes > budget:
        return None
    max_tb = budget // per_elem_bytes
    best = None
    for cand in range(1, B + 1):
        if B % cand:
            continue
        if cand > max_tb:
            break
        if B >= 2 and B // cand < 2:
            continue
        best = cand
    return best if best is not None else 1


def se_layer_pallas(x, w1, b1, w2t, b2t, *,
                    vmem_block_budget_bytes=None,
                    force_two_pass=False):
    """SELayer forward.  x: (B, C, H, W) -> (B, C, H, W).

    Parameter layouts (channels on the sublane axis inside the kernel):
      w1  (C, Cr) : transpose of Conv2d(C, Cr, 1).weight
      b1  (1, Cr)
      w2t (C, Cr) : Conv2d(Cr, C, 1).weight in its natural (out, in) layout
      b2t (C, 1)
    """
    B, C, H, W = x.shape
    HW = H * W
    x_flat = x.reshape(B, C, HW)
    itemsize = x_flat.dtype.itemsize
    budget = (int(vmem_block_budget_bytes) if vmem_block_budget_bytes is not None
              else _derived_block_budget_bytes())
    per_elem = 4 * C * HW * itemsize     # double-buffered in+out per batch elem
    tb = None if force_two_pass else _choose_batch_tile(B, per_elem, budget)
    if tb is None:
        out_flat = _se_fused_two_phase(x_flat, w1, b1, w2t, b2t, budget)
    else:
        out_flat = _se_single_pass(x_flat, w1, b1, w2t, b2t, tb)
    return out_flat.reshape(B, C, H, W)


def se_layer_ref(x, w1, b1, w2t, b2t):
    """Pure-JAX reference matching the PyTorch SELayer forward."""
    pooled = jnp.mean(x, axis=(2, 3))                        # (B, C)
    h = jnp.maximum(pooled @ w1 + b1, 0.0)                   # (B, Cr)
    g = jax.nn.sigmoid(h @ w2t.T + b2t.T)                    # (B, C)
    return x * g[:, :, None, None]


if __name__ == "__main__":
    # Shapes consistent with the module: channel=32, reduction=16 -> Cr=2.
    C = 32
    reduction = 16
    Cr = max(C // reduction, 1)

    key = jax.random.PRNGKey(0)
    kx, k1, k2, k3, k4, kx2, kx3 = jax.random.split(key, 7)

    # Conv2d(C, Cr, 1).weight is (Cr, C, 1, 1): store its transpose as (C, Cr).
    w1 = jax.random.normal(k1, (C, Cr), dtype=jnp.float32) * 0.1
    b1 = jax.random.normal(k2, (1, Cr), dtype=jnp.float32) * 0.1
    # Conv2d(Cr, C, 1).weight is (C, Cr, 1, 1): natural (C, Cr) layout.
    w2t = jax.random.normal(k3, (C, Cr), dtype=jnp.float32) * 0.1
    b2t = jax.random.normal(k4, (C, 1), dtype=jnp.float32) * 0.1

    # 1) Fast path, TB=1 (B=2 keeps >=2 parallel steps).
    x = jax.random.normal(kx, (2, C, 16, 16), dtype=jnp.float32)
    ref = se_layer_ref(x, w1, b1, w2t, b2t)
    out = jax.block_until_ready(se_layer_pallas(x, w1, b1, w2t, b2t))
    assert out.shape == x.shape
    assert jnp.allclose(out, ref, atol=1e-5, rtol=1e-5), "single-pass mismatch"

    # 2) Fast path with batched blocks (B=4 -> TB=2, grid=(2,)).
    x4 = jax.random.normal(kx2, (4, C, 16, 16), dtype=jnp.float32)
    ref4 = se_layer_ref(x4, w1, b1, w2t, b2t)
    out4 = jax.block_until_ready(se_layer_pallas(x4, w1, b1, w2t, b2t))
    assert jnp.allclose(out4, ref4, atol=1e-5, rtol=1e-5), "batched-pass mismatch"

    # 3) VMEM-constrained fused two-phase path (forced with a tiny budget so
    #    the accumulator / phase pipeline is exercised).
    out2 = jax.block_until_ready(
        se_layer_pallas(x, w1, b1, w2t, b2t,
                        force_two_pass=True,
                        vmem_block_budget_bytes=64 * 1024))
    assert jnp.allclose(out2, ref, atol=1e-5, rtol=1e-5), "two-phase mismatch"

    # 4) Two-phase path with HW not a multiple of 128 (exercises the padding;
    #    the mean still divides by the true HW, so numerics are exact).
    x3 = jax.random.normal(kx3, (2, C, 10, 10), dtype=jnp.float32)
    ref3 = se_layer_ref(x3, w1, b1, w2t, b2t)
    out3 = jax.block_until_ready(
        se_layer_pallas(x3, w1, b1, w2t, b2t,
                        force_two_pass=True,
                        vmem_block_budget_bytes=64 * 1024))
    assert jnp.allclose(out3, ref3, atol=1e-5, rtol=1e-5), "padded two-phase mismatch"

    print("KERNEL_OK")
</pallas_src>

<mosaic_0001>
module attributes {stable_mosaic.version = 11 : i64} {
  func.func @kernel(%arg0: i32, %arg1: memref<1x32x256xf32, #tpu.memory_space<vmem>>, %arg2: memref<32x2xf32, #tpu.memory_space<vmem>>, %arg3: memref<1x2xf32, #tpu.memory_space<vmem>>, %arg4: memref<32x2xf32, #tpu.memory_space<vmem>>, %arg5: memref<32x1xf32, #tpu.memory_space<vmem>>, %arg6: memref<1x32x256xf32, #tpu.memory_space<vmem>>) attributes {dimension_semantics = [#tpu.dimension_semantics<parallel>], iteration_bounds = array<i64: 2>, scalar_prefetch = 0 : i64, scratch_operands = 0 : i64, tpu.core_type = #tpu.core_type<tc>, window_params = [{transform_indices = @transform_0, window_bounds = array<i64: 1, 32, 256>}, {pipeline_mode = #tpu.pipeline_mode<synchronous>, transform_indices = @transform_1, window_bounds = array<i64: 32, 2>}, {pipeline_mode = #tpu.pipeline_mode<synchronous>, transform_indices = @transform_2, window_bounds = array<i64: 1, 2>}, {pipeline_mode = #tpu.pipeline_mode<synchronous>, transform_indices = @transform_3, window_bounds = array<i64: 32, 2>}, {pipeline_mode = #tpu.pipeline_mode<synchronous>, transform_indices = @transform_4, window_bounds = array<i64: 32, 1>}, {transform_indices = @transform_5, window_bounds = array<i64: 1, 32, 256>}]} {
    %c0 = arith.constant 0 : index
    %c0_0 = arith.constant 0 : index
    %c0_1 = arith.constant 0 : index
    %0 = vector.load %arg1[%c0, %c0_0, %c0_1] : memref<1x32x256xf32, #tpu.memory_space<vmem>>, vector<1x32x256xf32>
    %cst = arith.constant dense<0.000000e+00> : vector<1x32xf32>
    %1 = vector.multi_reduction <add>, %0, %cst [2] : vector<1x32x256xf32> to vector<1x32xf32>
    %2 = vector.shape_cast %1 : vector<1x32xf32> to vector<1x32x1xf32>
    %cst_2 = arith.constant 3.906250e-03 : f32
    %3 = vector.broadcast %cst_2 : f32 to vector<1x32x1xf32>
    %4 = arith.mulf %2, %3 : vector<1x32x1xf32>
    %c0_3 = arith.constant 0 : index
    %c0_4 = arith.constant 0 : index
    %5 = vector.load %arg2[%c0_3, %c0_4] : memref<32x2xf32, #tpu.memory_space<vmem>>, vector<32x2xf32>
    %c0_5 = arith.constant 0 : index
    %c0_6 = arith.constant 0 : index
    %6 = vector.load %arg3[%c0_5, %c0_6] : memref<1x2xf32, #tpu.memory_space<vmem>>, vector<1x2xf32>
    %c0_7 = arith.constant 0 : index
    %c0_8 = arith.constant 0 : index
    %7 = vector.load %arg4[%c0_7, %c0_8] : memref<32x2xf32, #tpu.memory_space<vmem>>, vector<32x2xf32>
    %c0_9 = arith.constant 0 : index
    %c0_10 = arith.constant 0 : index
    %8 = vector.load %arg5[%c0_9, %c0_10] : memref<32x1xf32, #tpu.memory_space<vmem>>, vector<32x1xf32>
    %9 = vector.shape_cast %5 : vector<32x2xf32> to vector<1x32x2xf32>
    %10 = vector.broadcast %4 : vector<1x32x1xf32> to vector<1x32x2xf32>
    %11 = arith.mulf %9, %10 : vector<1x32x2xf32>
    %cst_11 = arith.constant dense<0.000000e+00> : vector<1x2xf32>
    %12 = vector.multi_reduction <add>, %11, %cst_11 [1] : vector<1x32x2xf32> to vector<1x2xf32>
    %13 = vector.shape_cast %12 : vector<1x2xf32> to vector<1x1x2xf32>
    %14 = vector.shape_cast %6 : vector<1x2xf32> to vector<1x1x2xf32>
    %15 = arith.addf %13, %14 : vector<1x1x2xf32>
    %cst_12 = arith.constant 0.000000e+00 : f32
    %16 = vector.broadcast %cst_12 : f32 to vector<1x1x2xf32>
    %17 = arith.maximumf %15, %16 : vector<1x1x2xf32>
    %18 = vector.shape_cast %7 : vector<32x2xf32> to vector<1x32x2xf32>
    %19 = vector.broadcast %17 : vector<1x1x2xf32> to vector<1x32x2xf32>
    %20 = arith.mulf %18, %19 : vector<1x32x2xf32>
    %cst_13 = arith.constant dense<0.000000e+00> : vector<1x32xf32>
    %21 = vector.multi_reduction <add>, %20, %cst_13 [2] : vector<1x32x2xf32> to vector<1x32xf32>
    %22 = vector.shape_cast %21 : vector<1x32xf32> to vector<1x32x1xf32>
    %23 = vector.shape_cast %8 : vector<32x1xf32> to vector<1x32x1xf32>
    %24 = arith.addf %22, %23 : vector<1x32x1xf32>
    %25 = arith.negf %24 : vector<1x32x1xf32>
    %26 = math.exp %25 : vector<1x32x1xf32>
    %cst_14 = arith.constant 1.000000e+00 : f32
    %27 = vector.broadcast %cst_14 : f32 to vector<1x32x1xf32>
    %28 = arith.addf %27, %26 : vector<1x32x1xf32>
    %29 = arith.divf %27, %28 : vector<1x32x1xf32>
    %30 = vector.broadcast %29 : vector<1x32x1xf32> to vector<1x32x256xf32>
    %31 = arith.mulf %0, %30 : vector<1x32x256xf32>
    %c0_15 = arith.constant 0 : index
    %c0_16 = arith.constant 0 : index
    %c0_17 = arith.constant 0 : index
    %32 = vector.load %arg6[%c0_15, %c0_16, %c0_17] : memref<1x32x256xf32, #tpu.memory_space<vmem>>, vector<1x32x256xf32>
    tpu.vector_store %arg6[%c0_15, %c0_16, %c0_17], %31 {strides = array<i32>} : memref<1x32x256xf32, #tpu.memory_space<vmem>>, vector<1x32x256xf32>,
    return
  }
  func.func @transform_0(%arg0: i32) -> (i32, i32, i32) {
    %c0_i32 = arith.constant 0 : i32
    %c0_i32_0 = arith.constant 0 : i32
    %c0_i32_1 = arith.constant 0 : i32
    return %arg0, %c0_i32, %c0_i32_0 : i32, i32, i32
  }
  func.func @transform_1(%arg0: i32) -> (i32, i32) {
    %c0_i32 = arith.constant 0 : i32
    %c0_i32_0 = arith.constant 0 : i32
    %c0_i32_1 = arith.constant 0 : i32
    return %c0_i32, %c0_i32_0 : i32, i32
  }
  func.func @transform_2(%arg0: i32) -> (i32, i32) {
    %c0_i32 = arith.constant 0 : i32
    %c0_i32_0 = arith.constant 0 : i32
    %c0_i32_1 = arith.constant 0 : i32
    return %c0_i32, %c0_i32_0 : i32, i32
  }
  func.func @transform_3(%arg0: i32) -> (i32, i32) {
    %c0_i32 = arith.constant 0 : i32
    %c0_i32_0 = arith.constant 0 : i32
    %c0_i32_1 = arith.constant 0 : i32
    return %c0_i32, %c0_i32_0 : i32, i32
  }
  func.func @transform_4(%arg0: i32) -> (i32, i32) {
    %c0_i32 = arith.constant 0 : i32
    %c0_i32_0 = arith.constant 0 : i32
    %c0_i32_1 = arith.constant 0 : i32
    return %c0_i32, %c0_i32_0 : i32, i32
  }
  func.func @transform_5(%arg0: i32) -> (i32, i32, i32) {
    %c0_i32 = arith.constant 0 : i32
    %c0_i32_0 = arith.constant 0 : i32
    %c0_i32_1 = arith.constant 0 : i32
    return %arg0, %c0_i32, %c0_i32_0 : i32, i32, i32
  }
}

</mosaic_0001>

<llo_original>
// kernel: tpu_custom_call.1
$region0: #{tpu_custom_call.1}
  #allocation0 [shape = 'u32[]', space=smem, size = 0x4, offset = 0x4, fixed_abs, tag = 'smem constant byte address 0x4 - core index']
  #allocation1 [shape = 'u32[72,128]{1,0:T(1,128)}', space=vmem, size = 0x9000, scoped, tag = 'internal scratch']
  %s0 = inlined_call_operand.hbm [shape: f32[2,32,256], index: 0, kind: input, shape index: {}]
  %s1 = inlined_call_operand.vmem [shape: f32[32,2], index: 1, kind: input, shape index: {}]
  %s2 = inlined_call_operand.vmem [shape: f32[1,2], index: 2, kind: input, shape index: {}]
  %s3 = inlined_call_operand.vmem [shape: f32[32,2], index: 3, kind: input, shape index: {}]
  %s4 = inlined_call_operand.vmem [shape: f32[32,1], index: 4, kind: input, shape index: {}]
  %s5 = inlined_call_operand.hbm [shape: f32[2,32,256], index: 5, kind: output, shape index: {}]
  %s6 = sld [smem:[#allocation0]]
  $region57: #{tpu_custom_call.1} parent=0
    _
  %s8 = ssub.s32 1, %s6
  %s9 = scalar_select 0, %s8, %s6
  $region1: #{tpu_custom_call.1} parent=0
    #allocation2 [shape = 'u8[65536]{0}', space=vmem, size = 0x10000, scoped, tag = 'input window, operand 0']
    #allocation3 [shape = 's32[2]{0}', space=sflag, size = 0x8, scoped, tag = 'scoped memory for tpu_custom_call.1']
    #allocation4 [shape = 's32[2]{0}', space=sflag, size = 0x8, scoped, tag = 'scoped memory for tpu_custom_call.1']
    #allocation5 [shape = 'u8[65536]{0}', space=vmem, size = 0x10000, scoped, tag = 'output window, operand 0']
    %10 = vsyncpa [#allocation3], 0
    %s11 = scalar_lea.sflag [#allocation3], 1
    %12 = vsyncpa %s11, 0
    %13 = vsyncpa [#allocation4], 0
    %s14 = scalar_lea.sflag [#allocation4], 1
    %15 = vsyncpa %s14, 0
    loop: start=0, step=1, limit=4
    $region2: #{tpu_custom_call.1} parent=1 // loop_pre_header
      _
    $region3: #{tpu_custom_call.1} parent=1 // loop_header
      %s17 = sphi 0, %s21
      %p18 = scmp.ge.s32.totalorder %s17, 4
      %s27 = sphi 0, %s29
      %s30 = sphi 0, %s27
      %s31 = sphi 0, %s30
      %s47 = sphi 0, %s31
      %s51 = sphi 0, %s51
      %s53 = sphi 0, %s51
      %s54 = sphi 0, %s53
      %s68 = sphi 0, %s54
      %s72 = sphi 0, %s72
      %s74 = sphi 0, %s72
      %s75 = sphi 0, %s74
      %s89 = sphi 0, %s75
      %s93 = sphi 0, %s93
      %s95 = sphi 0, %s93
      %s96 = sphi 0, %s95
      %s110 = sphi 0, %s96
      %s114 = sphi 0, %s114
      %s116 = sphi 0, %s114
      %s117 = sphi 0, %s116
      %s131 = sphi 0, %s117
      %s137 = sphi 0, %s139
      %s140 = sphi 0, %s137
      %s141 = sphi 0, %s140
      %s157 = sphi 0, %s141
    $region4: #{tpu_custom_call.1} parent=1 // loop_header_branch
      %20 = sbr.rel (%p18) target = $region8
    $region5: #{tpu_custom_call.1} parent=1 // loop_body
      %s22 = ssub.s32 %s17, 1
      %s23 = ssub.s32 %s17, 2
      %s24 = sadd.s32 %s17, 1
      %s25 = ssub.s32 %s17, %s24
      %p26 = scmp.eq.s32.totalorder %s25, 0
      %s28 = sadd.s32 %s27, 1
      %s29 = scalar_select %p26, %s27, %s28
      %p32 = pneg %p26
      %p33 = scmp.eq.s32.totalorder %s17, 1
      %p34 = por %p32, %p33
      %p35 = scmp.ne.s32.totalorder %s27, %s30
      %p36 = scmp.eq.s32.totalorder %s17, 0
      %p37 = por %p35, %p36
      %p38 = scmp.ne.s32.totalorder %s27, %s30
      %p39 = scmp.eq.s32.totalorder %s22, 1
      %p40 = por %p38, %p39
      %p41 = scmp.ne.s32.totalorder %s30, %s31
      %p42 = scmp.eq.s32.totalorder %s22, 0
      %p43 = por %p41, %p42
      %p44 = scmp.ne.s32.totalorder %s30, %s31
      %p45 = scmp.eq.s32.totalorder %s23, 1
      %p46 = por %p44, %p45
      %p48 = scmp.ne.s32.totalorder %s31, %s47
      %p49 = scmp.eq.s32.totalorder %s23, 0
      %p50 = por %p48, %p49
      %s52 = sadd.s32 %s51, 1
      %p55 = scmp.eq.s32.totalorder %s17, 1
      %p56 = scmp.ne.s32.totalorder %s51, %s53
      %p57 = scmp.eq.s32.totalorder %s17, 0
      %p58 = por %p56, %p57
      %p59 = scmp.ne.s32.totalorder %s51, %s53
      %p60 = scmp.eq.s32.totalorder %s22, 1
      %p61 = por %p59, %p60
      %p62 = scmp.ne.s32.totalorder %s53, %s54
      %p63 = scmp.eq.s32.totalorder %s22, 0
      %p64 = por %p62, %p63
      %p65 = scmp.ne.s32.totalorder %s53, %s54
      %p66 = scmp.eq.s32.totalorder %s23, 1
      %p67 = por %p65, %p66
      %p69 = scmp.ne.s32.totalorder %s54, %s68
      %p70 = scmp.eq.s32.totalorder %s23, 0
      %p71 = por %p69, %p70
      %s73 = sadd.s32 %s72, 1
      %p76 = scmp.eq.s32.totalorder %s17, 1
      %p77 = scmp.ne.s32.totalorder %s72, %s74
      %p78 = scmp.eq.s32.totalorder %s17, 0
      %p79 = por %p77, %p78
      %p80 = scmp.ne.s32.totalorder %s72, %s74
      %p81 = scmp.eq.s32.totalorder %s22, 1
      %p82 = por %p80, %p81
      %p83 = scmp.ne.s32.totalorder %s74, %s75
      %p84 = scmp.eq.s32.totalorder %s22, 0
      %p85 = por %p83, %p84
      %p86 = scmp.ne.s32.totalorder %s74, %s75
      %p87 = scmp.eq.s32.totalorder %s23, 1
      %p88 = por %p86, %p87
      %p90 = scmp.ne.s32.totalorder %s75, %s89
      %p91 = scmp.eq.s32.totalorder %s23, 0
      %p92 = por %p90, %p91
      %s94 = sadd.s32 %s93, 1
      %p97 = scmp.eq.s32.totalorder %s17, 1
      %p98 = scmp.ne.s32.totalorder %s93, %s95
      %p99 = scmp.eq.s32.totalorder %s17, 0
      %p100 = por %p98, %p99
      %p101 = scmp.ne.s32.totalorder %s93, %s95
      %p102 = scmp.eq.s32.totalorder %s22, 1
      %p103 = por %p101, %p102
      %p104 = scmp.ne.s32.totalorder %s95, %s96
      %p105 = scmp.eq.s32.totalorder %s22, 0
      %p106 = por %p104, %p105
      %p107 = scmp.ne.s32.totalorder %s95, %s96
      %p108 = scmp.eq.s32.totalorder %s23, 1
      %p109 = por %p107, %p108
      %p111 = scmp.ne.s32.totalorder %s96, %s110
      %p112 = scmp.eq.s32.totalorder %s23, 0
      %p113 = por %p111, %p112
      %s115 = sadd.s32 %s114, 1
      %p118 = scmp.eq.s32.totalorder %s17, 1
      %p119 = scmp.ne.s32.totalorder %s114, %s116
      %p120 = scmp.eq.s32.totalorder %s17, 0
      %p121 = por %p119, %p120
      %p122 = scmp.ne.s32.totalorder %s114, %s116
      %p123 = scmp.eq.s32.totalorder %s22, 1
      %p124 = por %p122, %p123
      %p125 = scmp.ne.s32.totalorder %s116, %s117
      %p126 = scmp.eq.s32.totalorder %s22, 0
      %p127 = por %p125, %p126
      %p128 = scmp.ne.s32.totalorder %s116, %s117
      %p129 = scmp.eq.s32.totalorder %s23, 1
      %p130 = por %p128, %p129
      %p132 = scmp.ne.s32.totalorder %s117, %s131
      %p133 = scmp.eq.s32.totalorder %s23, 0
      %p134 = por %p132, %p133
      %s135 = ssub.s32 %s17, %s24
      %p136 = scmp.eq.s32.totalorder %s135, 0
      %s138 = sadd.s32 %s137, 1
      %s139 = scalar_select %p136, %s137, %s138
      %p142 = pneg %p136
      %p143 = scmp.eq.s32.totalorder %s17, 1
      %p144 = por %p142, %p143
      %p145 = scmp.ne.s32.totalorder %s137, %s140
      %p146 = scmp.eq.s32.totalorder %s17, 0
      %p147 = por %p145, %p146
      %p148 = scmp.ne.s32.totalorder %s137, %s140
      %p149 = scmp.eq.s32.totalorder %s22, 1
      %p150 = por %p148, %p149
      %p151 = scmp.ne.s32.totalorder %s140, %s141
      %p152 = scmp.eq.s32.totalorder %s22, 0
      %p153 = por %p151, %p152
      %p154 = scmp.ne.s32.totalorder %s140, %s141
      %p155 = scmp.eq.s32.totalorder %s23, 1
      %p156 = por %p154, %p155
      %p158 = scmp.ne.s32.totalorder %s141, %s157
      %p159 = scmp.eq.s32.totalorder %s23, 0
      %p160 = por %p158, %p159
      %p161 = scmp.le.s32.totalorder 1, %s17
      %p162 = scmp.lt.s32.totalorder %s17, 3
      %p163 = pnand %p161, %p162
      %p164 = pneg %p163
      // Predicated region
      $region9: #{tpu_custom_call.1} parent=5 // pred_check
        _
      $region10: #{tpu_custom_call.1} parent=5 // pred_check_branch
        %166 = sbr.rel (%p163) target = $region12
      $region11: #{tpu_custom_call.1} parent=5 // pred_region
        %s167 = ssub.s32 %s17, 1
        // Predicated region
        $region13: #{tpu_custom_call.1} parent=11 // pred_check
          %p168 = pneg %p64
        $region14: #{tpu_custom_call.1} parent=11 // pred_check_branch
          %170 = sbr.rel (%p168) target = $region16
        $region15: #{tpu_custom_call.1} parent=11 // pred_region
          _
        $region16: #{tpu_custom_call.1} parent=11 // pred_fallthru
          _
        // Predicated region
        $region17: #{tpu_custom_call.1} parent=11 // pred_check
          %p171 = pneg %p85
        $region18: #{tpu_custom_call.1} parent=11 // pred_check_branch
          %173 = sbr.rel (%p171) target = $region20
        $region19: #{tpu_custom_call.1} parent=11 // pred_region
          _
        $region20: #{tpu_custom_call.1} parent=11 // pred_fallthru
          _
        // Predicated region
        $region21: #{tpu_custom_call.1} parent=11 // pred_check
          %p174 = pneg %p106
        $region22: #{tpu_custom_call.1} parent=11 // pred_check_branch
          %176 = sbr.rel (%p174) target = $region24
        $region23: #{tpu_custom_call.1} parent=11 // pred_region
          _
        $region24: #{tpu_custom_call.1} parent=11 // pred_fallthru
          _
        // Predicated region
        $region25: #{tpu_custom_call.1} parent=11 // pred_check
          %p177 = pneg %p127
        $region26: #{tpu_custom_call.1} parent=11 // pred_check_branch
          %179 = sbr.rel (%p177) target = $region28
        $region27: #{tpu_custom_call.1} parent=11 // pred_region
          _
        $region28: #{tpu_custom_call.1} parent=11 // pred_fallthru
          _
      $region12: #{tpu_custom_call.1} parent=5 // pred_fallthru
        _
      %p180 = scmp.lt.s32.totalorder %s17, 2
      // Predicated region
      $region29: #{tpu_custom_call.1} parent=5 // pred_check
        %p181 = pneg %p180
      $region30: #{tpu_custom_call.1} parent=5 // pred_check_branch
        %183 = sbr.rel (%p181) target = $region32
      $region31: #{tpu_custom_call.1} parent=5 // pred_region
        // Predicated region
        $region33: #{tpu_custom_call.1} parent=31 // pred_check
          %p184 = pneg %p37
        $region34: #{tpu_custom_call.1} parent=31 // pred_check_branch
          %186 = sbr.rel (%p184) target = $region36
        $region35: #{tpu_custom_call.1} parent=31 // pred_region
          %s187 = sand.u32 %s27, 1
          %s188 = scalar_lea.sflag [#allocation3], %s187
          %s189 = sand.u32 %s27, 1
          %s190 = smul.addr %s189, 64
          %s191 = scalar_lea.vmem [#allocation2], %s190
          %193 = vsyncadd %s188, 0
          %s194 = smul.addr %s17, 8
          %s195 = smul.addr %s194, 8
          %s196 = scalar_lea.hbm %s0, %s195
          %s197 = sshll.u32 %s196, 4
          %s198 = int_to_ptr.hbm [resolvable:$true] %s197
          %s199 = sshll.u32 %s191, 4
          %s200 = int_to_ptr.vmem [resolvable:$true] %s199
          %205 = dma.hbm_to_vmem [thread:$0]  %s198, 1024, %s200, %s188, 256, 256, 16
        $region36: #{tpu_custom_call.1} parent=31 // pred_fallthru
          _
      $region32: #{tpu_custom_call.1} parent=5 // pred_fallthru
        _
      %p206 = scmp.le.s32.totalorder 1, %s17
      %p207 = scmp.lt.s32.totalorder %s17, 3
      %p208 = pnand %p206, %p207
      %p209 = pneg %p208
      // Predicated region
      $region37: #{tpu_custom_call.1} parent=5 // pred_check
        _
      $region38: #{tpu_custom_call.1} parent=5 // pred_check_branch
        %211 = sbr.rel (%p208) target = $region40
      $region39: #{tpu_custom_call.1} parent=5 // pred_region
        %s212 = ssub.s32 %s17, 1
        %s213 = sand.u32 %s30, 1
        %s214 = scalar_lea.sflag [#allocation3], %s213
        %s215 = sand.u32 %s30, 1
        %s216 = smul.addr %s215, 64
        %s217 = scalar_lea.vmem [#allocation2], %s216
        // Predicated region
        $region41: #{tpu_custom_call.1} parent=39 // pred_check
          %p218 = pneg %p43
        $region42: #{tpu_custom_call.1} parent=39 // pred_check_branch
          %220 = sbr.rel (%p218) target = $region44
        $region43: #{tpu_custom_call.1} parent=39 // pred_region
          %222 = dma.done %s214, 1024
        $region44: #{tpu_custom_call.1} parent=39 // pred_fallthru
          _
        %s223 = sand.u32 %s30, 1
        %s224 = scalar_lea.sflag [#allocation3], %s223
        %s225 = sand.u32 %s30, 1
        %s226 = smul.addr %s225, 64
        %s227 = scalar_lea.vmem [#allocation2], %s226
        %p228 = pneg %p43
        %p229 = pneg %p40
        %p230 = pneg %p64
        %p231 = pneg %p61
        %p232 = pneg %p85
        %p233 = pneg %p82
        %p234 = pneg %p106
        %p235 = pneg %p103
        %p236 = pneg %p127
        %p237 = pneg %p124
        %p238 = pneg %p153
        %p239 = pneg %p150
        %s240 = sand.u32 %s140, 1
        %s241 = scalar_lea.sflag [#allocation4], %s240
        %s242 = sand.u32 %s140, 1
        %s243 = smul.addr %s242, 64
        %s244 = scalar_lea.vmem [#allocation5], %s243
        %v245 = vld [vmem:[%s217] sm:$0xff]
        %v246 = vld [vmem:[%s217 + $0x8] sm:$0xff]
        %v247 = vld [vmem:[%s217 + $0x10] sm:$0xff]
        %v248 = vld [vmem:[%s217 + $0x18] sm:$0xff]
        %v249 = vld [vmem:[%s217 + $0x20] sm:$0xff]
        %v250 = vld [vmem:[%s217 + $0x28] sm:$0xff]
        %v251 = vld [vmem:[%s217 + $0x30] sm:$0xff]
        %v252 = vld [vmem:[%s217 + $0x38] sm:$0xff]
        %v253 = vadd.f32 %v245, %v246
        %254 = vadd.xlane.f32.xlu0 %v253
        %v255 = vpop.xlane.xlu0 %254
        %v256 = vadd.f32 %v247, %v248
        %257 = vadd.xlane.f32.xlu0 %v256
        %v258 = vpop.xlane.xlu0 %257
        %v259 = vadd.f32 %v249, %v250
        %260 = vadd.xlane.f32.xlu0 %v259
        %v261 = vpop.xlane.xlu0 %260
        %v262 = vadd.f32 %v251, %v252
        %263 = vadd.xlane.f32.xlu0 %v262
        %v264 = vpop.xlane.xlu0 %263
        %v265 = vmul.f32 %v255, 0.00390625
        %v266 = vmul.f32 %v258, 0.00390625
        %v267 = vmul.f32 %v261, 0.00390625
        %v268 = vmul.f32 %v264, 0.00390625
        %v269 = vld [vmem:[%s1] sm:$0xff]
        %v270 = vld [vmem:[%s1 + $0x8] sm:$0xff]
        %v271 = vld [vmem:[%s1 + $0x10] sm:$0xff]
        %v272 = vld [vmem:[%s1 + $0x18] sm:$0xff]
        %v273 = vld [vmem:[%s2] sm:$0x1]
        %v274 = vld [vmem:[%s3] sm:$0xff]
        %v275 = vld [vmem:[%s3 + $0x8] sm:$0xff]
        %v276 = vld [vmem:[%s3 + $0x10] sm:$0xff]
        %v277 = vld [vmem:[%s3 + $0x18] sm:$0xff]
        %v278 = vld [vmem:[%s4] sm:$0xff]
        %v279 = vld [vmem:[%s4 + $0x8] sm:$0xff]
        %v280 = vld [vmem:[%s4 + $0x10] sm:$0xff]
        %v281 = vld [vmem:[%s4 + $0x18] sm:$0xff]
        %v282 = vmul.f32 %v269, %v265
        %v283 = vmul.f32 %v270, %v266
        %v284 = vmul.f32 %v271, %v267
        %v285 = vmul.f32 %v272, %v268
        %vm286 = vcmask 15360
        %v287 = vsel %vm286, %v282, 0.0
        %v288 = vsel %vm286, %v283, 0.0
        %v289 = vadd.f32 %v287, %v288
        %v290 = vsel %vm286, %v284, 0.0
        %v291 = vadd.f32 %v289, %v290
        %v292 = vsel %vm286, %v285, 0.0
        %v293 = vadd.f32 %v291, %v292
        %v294 = vrot.slane %v293, 4
        %v295 = vadd.f32 %v293, %v294
        %v296 = vrot.slane %v295, 2
        %v297 = vadd.f32 %v295, %v296
        %v298 = vrot.slane %v297, 1
        %v299 = vadd.f32 %v297, %v298
        %v300 = vadd.f32 %v299, %v273
        %v301 = vmax.f32 %v300, 0.0
        %v302 = vperm.slane %v301, 0
        %v303 = vmul.f32 %v274, %v302
        %v304 = vmul.f32 %v275, %v302
        %v305 = vmul.f32 %v276, %v302
        %v306 = vmul.f32 %v277, %v302
        %v307 = vsel %vm286, %v303, 0.0
        %308 = vadd.xlane.f32.xlu0 %v307
        %v309 = vpop.xlane.xlu0 %308
        %v310 = vsel %vm286, %v304, 0.0
        %311 = vadd.xlane.f32.xlu0 %v310
        %v312 = vpop.xlane.xlu0 %311
        %v313 = vsel %vm286, %v305, 0.0
        %314 = vadd.xlane.f32.xlu0 %v313
        %v315 = vpop.xlane.xlu0 %314
        %v316 = vsel %vm286, %v306, 0.0
        %317 = vadd.xlane.f32.xlu0 %v316
        %v318 = vpop.xlane.xlu0 %317
        %v319 = vadd.f32 %v309, %v278
        %v320 = vadd.f32 %v312, %v279
        %v321 = vadd.f32 %v315, %v280
        %v322 = vadd.f32 %v318, %v281
        %v323 = vxor.u32 %v319, 2147483648
        %v324 = vxor.u32 %v320, 2147483648
        %v325 = vxor.u32 %v321, 2147483648
        %v326 = vxor.u32 %v322, 2147483648
        %v327 = vmul.f32 %v323, 1.442695
        %v328 = vpow.pop %v327
        %v329 = vmul.f32 %v324, 1.442695
        %v330 = vpow.pop %v329
        %v331 = vmul.f32 %v325, 1.442695
        %v332 = vpow.pop %v331
        %v333 = vmul.f32 %v326, 1.442695
        %v334 = vpow.pop %v333
        %v335 = vadd.f32 %v328, 1.0
        %v336 = vadd.f32 %v330, 1.0
        %v337 = vadd.f32 %v332, 1.0
        %v338 = vadd.f32 %v334, 1.0
        %v339 = vrcp.pop %v335
        %v340 = vmul.f32 %v335, %v339
        %v341 = vsub.f32 1.0, %v340
        %v342 = vmul.f32 %v339, %v341
        %v343 = vadd.f32 %v339, %v342
        %vm344 = vweird.f32 %v335
        %vm345 = vweird.f32 %v339
        %vm346 = vmor %vm344, %vm345
        %v347 = vsel %vm346, %v339, %v343
        %v348 = vand.u32 2147483647, %v335
        %vm349 = vcmp.eq.f32.partialorder %v348, 8.507059e+37
        %v350 = vand.u32 %v335, 2147483648
        %v351 = vor.u32 1.1754944e-38, %v350
        %v352 = vsel %vm349, %v351, %v347
        %v353 = vmul.f32 1.0, %v352
        %v354 = vrcp.pop %v336
        %v355 = vmul.f32 %v336, %v354
        %v356 = vsub.f32 1.0, %v355
        %v357 = vmul.f32 %v354, %v356
        %v358 = vadd.f32 %v354, %v357
        %vm359 = vweird.f32 %v336
        %vm360 = vweird.f32 %v354
        %vm361 = vmor %vm359, %vm360
        %v362 = vsel %vm361, %v354, %v358
        %v363 = vand.u32 2147483647, %v336
        %vm364 = vcmp.eq.f32.partialorder %v363, 8.507059e+37
        %v365 = vand.u32 %v336, 2147483648
        %v366 = vor.u32 1.1754944e-38, %v365
        %v367 = vsel %vm364, %v366, %v362
        %v368 = vmul.f32 1.0, %v367
        %v369 = vrcp.pop %v337
        %v370 = vmul.f32 %v337, %v369
        %v371 = vsub.f32 1.0, %v370
        %v372 = vmul.f32 %v369, %v371
        %v373 = vadd.f32 %v369, %v372
        %vm374 = vweird.f32 %v337
        %vm375 = vweird.f32 %v369
        %vm376 = vmor %vm374, %vm375
        %v377 = vsel %vm376, %v369, %v373
        %v378 = vand.u32 2147483647, %v337
        %vm379 = vcmp.eq.f32.partialorder %v378, 8.507059e+37
        %v380 = vand.u32 %v337, 2147483648
        %v381 = vor.u32 1.1754944e-38, %v380
        %v382 = vsel %vm379, %v381, %v377
        %v383 = vmul.f32 1.0, %v382
        %v384 = vrcp.pop %v338
        %v385 = vmul.f32 %v338, %v384
        %v386 = vsub.f32 1.0, %v385
        %v387 = vmul.f32 %v384, %v386
        %v388 = vadd.f32 %v384, %v387
        %vm389 = vweird.f32 %v338
        %vm390 = vweird.f32 %v384
        %vm391 = vmor %vm389, %vm390
        %v392 = vsel %vm391, %v384, %v388
        %v393 = vand.u32 2147483647, %v338
        %vm394 = vcmp.eq.f32.partialorder %v393, 8.507059e+37
        %v395 = vand.u32 %v338, 2147483648
        %v396 = vor.u32 1.1754944e-38, %v395
        %v397 = vsel %vm394, %v396, %v392
        %v398 = vmul.f32 1.0, %v397
        %400 = vset.pattern.permute.xlu0 0
        %401 = vperm.xlu0 %400, %v353
        %v402 = vpop.permute.xlu0 %401
        %405 = vset.pattern.permute.xlu0 0
        %406 = vperm.xlu0 %405, %v368
        %v407 = vpop.permute.xlu0 %406
        %410 = vset.pattern.permute.xlu0 0
        %411 = vperm.xlu0 %410, %v383
        %v412 = vpop.permute.xlu0 %411
        %415 = vset.pattern.permute.xlu0 0
        %416 = vperm.xlu0 %415, %v398
        %v417 = vpop.permute.xlu0 %416
        %v419 = vmul.f32 %v245, %v402
        %v420 = vmul.f32 %v246, %v402
        %v421 = vmul.f32 %v247, %v407
        %v422 = vmul.f32 %v248, %v407
        %v423 = vmul.f32 %v249, %v412
        %v424 = vmul.f32 %v250, %v412
        %v425 = vmul.f32 %v251, %v417
        %v426 = vmul.f32 %v252, %v417
        %427 = vst [vmem:[%s244] sm:$0xff] %v419
        %428 = vst [vmem:[%s244 + $0x8] sm:$0xff] %v420
        %429 = vst [vmem:[%s244 + $0x10] sm:$0xff] %v421
        %430 = vst [vmem:[%s244 + $0x18] sm:$0xff] %v422
        %431 = vst [vmem:[%s244 + $0x20] sm:$0xff] %v423
        %432 = vst [vmem:[%s244 + $0x28] sm:$0xff] %v424
        %433 = vst [vmem:[%s244 + $0x30] sm:$0xff] %v425
        %434 = vst [vmem:[%s244 + $0x38] sm:$0xff] %v426
        %s435 = sand.u32 %s140, 1
        %s436 = scalar_lea.sflag [#allocation4], %s435
        %s437 = sand.u32 %s140, 1
        %s438 = smul.addr %s437, 64
        %s439 = scalar_lea.vmem [#allocation5], %s438
        // Predicated region
        $region45: #{tpu_custom_call.1} parent=39 // pred_check
          %p440 = pneg %p150
        $region46: #{tpu_custom_call.1} parent=39 // pred_check_branch
          %442 = sbr.rel (%p440) target = $region48
        $region47: #{tpu_custom_call.1} parent=39 // pred_region
          %444 = vsyncadd %s436, 0
          %s445 = smul.addr %s22, 8
          %s446 = smul.addr %s445, 8
          %s447 = scalar_lea.hbm %s5, %s446
          %s448 = sshll.u32 %s439, 4
          %s449 = int_to_ptr.vmem [resolvable:$true] %s448
          %s450 = sshll.u32 %s447, 4
          %s451 = int_to_ptr.hbm [resolvable:$true] %s450
          %456 = dma.vmem_to_hbm [thread:$0]  %s449, 1024, %s451, %s436, 256, 256, 16
        $region48: #{tpu_custom_call.1} parent=39 // pred_fallthru
          _
      $region40: #{tpu_custom_call.1} parent=5 // pred_fallthru
        _
      %p457 = scmp.le.s32.totalorder 2, %s17
      // Predicated region
      $region49: #{tpu_custom_call.1} parent=5 // pred_check
        %p458 = pneg %p457
      $region50: #{tpu_custom_call.1} parent=5 // pred_check_branch
        %460 = sbr.rel (%p458) target = $region52
      $region51: #{tpu_custom_call.1} parent=5 // pred_region
        %s461 = ssub.s32 %s17, 2
        // Predicated region
        $region53: #{tpu_custom_call.1} parent=51 // pred_check
          %p462 = pneg %p156
        $region54: #{tpu_custom_call.1} parent=51 // pred_check_branch
          %464 = sbr.rel (%p462) target = $region56
        $region55: #{tpu_custom_call.1} parent=51 // pred_region
          %s465 = sand.u32 %s141, 1
          %s466 = scalar_lea.sflag [#allocation4], %s465
          %s467 = sand.u32 %s141, 1
          %s468 = smul.addr %s467, 64
          %s469 = scalar_lea.vmem [#allocation5], %s468
          %471 = dma.done %s466, 1024
        $region56: #{tpu_custom_call.1} parent=51 // pred_fallthru
          _
      $region52: #{tpu_custom_call.1} parent=5 // pred_fallthru
        _
    $region6: #{tpu_custom_call.1} parent=1 // loop_footer
      %s21 = sadd.s32 1, %s17
    $region7: #{tpu_custom_call.1} parent=1 // loop_footer_branch
      %16 = sbr.rel target = $region3
    $region8: #{tpu_custom_call.1} parent=1 // loop_exit
      _
    %472 = vsyncpa [#allocation3], 1
    %s473 = scalar_lea.sflag [#allocation3], 1
    %474 = vsyncpa %s473, 1
    %475 = vsyncpa [#allocation4], 1
    %s476 = scalar_lea.sflag [#allocation4], 1
    %477 = vsyncpa %s476, 1

</llo_original>
